<compile_context>
chip_gen: v6e
topology: v6e:2x2x1
jax: 0.10.0
libtpu: 0.0.40
codegen_flags: <defaults>
</compile_context>

<pallas_src>
import functools
import math

import jax
import jax.numpy as jnp
from jax import lax
from jax.experimental import pallas as pl
from jax.experimental.pallas import tpu as pltpu


# ---------------------------------------------------------------------------
# One-time probe: direction convention of pltpu.roll on this backend
# (guards tap orientation; result cached, run once outside jit).
# ---------------------------------------------------------------------------
_ROLL_IS_NP_CACHE = None


def _roll_matches_numpy():
    """True iff pltpu.roll(x, shift, axis) == jnp.roll(x, shift, axis)."""
    global _ROLL_IS_NP_CACHE
    if _ROLL_IS_NP_CACHE is None:
        def probe(x_ref, o_ref):
            o_ref[...] = pltpu.roll(x_ref[...], shift=1, axis=1)

        x = jnp.tile(jnp.arange(128, dtype=jnp.float32)[None, :], (8, 1))
        y = pl.pallas_call(
            probe, out_shape=jax.ShapeDtypeStruct((8, 128), jnp.float32))(x)
        _ROLL_IS_NP_CACHE = bool(y[0, 0] == 127.0)   # np.roll puts x[-1] at 0
    return _ROLL_IS_NP_CACHE


# ---------------------------------------------------------------------------
# Fused Pallas kernel: all ResidBlocks, grid=(Nblk,), activation kept in VMEM
# ---------------------------------------------------------------------------
def _resid_part_kernel(xm_hbm, wtap_ref, wvec_ref, out_ref, act_ref, in_sem,
                       *, nvalid, roll_is_np):
    # xm_hbm   : (Cmax+1, Ntot) f32 in HBM (pl.ANY): rows 0..Cmax = channel- and
    #            segment-padded input, row Cmax = valid-column mask.
    # wtap_ref : (1, 3, Cc, Cmax)  conv taps, rows [conv1 ; downsample]
    # wvec_ref : (1, Cc, Wv)       cols [0:NCh)=w2, NCh=gamma, NCh+1=beta, NCh+2=b2
    # out_ref  : (Nout, Ntot)      lane-dense output slab (written last step)
    # act_ref  : (Cmax+1, Ntot)    VMEM resident activation (+ mask row)
    blk = pl.program_id(0)
    nblk = pl.num_programs(0)
    cmax = act_ref.shape[0] - 1
    ntot = act_ref.shape[1]
    nout = out_ref.shape[0]
    cc = wtap_ref.shape[2]
    nch = cc - nout
    eps = 1e-5

    # one DMA of the pre-laid-out input (+ mask row) into the resident scratch
    @pl.when(blk == 0)
    def _():
        cp = pltpu.make_async_copy(xm_hbm, act_ref, in_sem)
        cp.start()
        cp.wait()

    x = act_ref[0:cmax, :]              # (Cmax, Ntot) resident activation
    mask = act_ref[cmax:cmax + 1, :]    # (1, Ntot) 1 at valid cols, 0 at pads

    # +-1 conv taps via lane rotation (XLU).  Inter-segment pad columns are
    # zero, so the circular wrap reproduces the conv's zero padding exactly.
    sh_prev, sh_next = (1, ntot - 1) if roll_is_np else (ntot - 1, 1)
    x_prev = pltpu.roll(x, shift=sh_prev, axis=1)   # column l holds x[l-1]
    x_next = pltpu.roll(x, shift=sh_next, axis=1)   # column l holds x[l+1]

    # fused [conv1 ; downsample] = three accumulating MXU matmuls
    z = (jnp.dot(wtap_ref[0, 0], x_prev, preferred_element_type=jnp.float32)
         + jnp.dot(wtap_ref[0, 1], x, preferred_element_type=jnp.float32)
         + jnp.dot(wtap_ref[0, 2], x_next, preferred_element_type=jnp.float32))

    wv = wvec_ref[0]                    # (Cc, Wv)
    w2 = wv[0:nout, 0:nch]              # conv2 (k=1) weights
    gamma = wv[:, nch:nch + 1]          # shared bn1 affine (stacked twice)
    beta = wv[:, nch + 1:nch + 2]
    b2 = wv[0:nout, nch + 2:nch + 3]

    # training-mode BatchNorm over valid columns only (masked, two-pass var).
    # Per-channel stats are row-wise, so the single pass over the concatenated
    # [conv1 ; downsample] rows is exact.
    inv_n = 1.0 / float(nvalid)
    zm = z * mask
    mean = jnp.sum(zm, axis=1, keepdims=True) * inv_n
    zc = zm - mean * mask                                   # zero at pad cols
    var = jnp.sum(zc * zc, axis=1, keepdims=True) * inv_n   # >= 0 by construction
    zn = zc * (lax.rsqrt(var + eps) * gamma) + beta

    y = jnp.maximum(zn[0:nch, :], 0.0)                      # relu(bn(conv1))
    y = jnp.dot(w2, y, preferred_element_type=jnp.float32) + b2   # conv2 (k=1)
    out = jnp.maximum(zn[nch:, :] + y, 0.0) * mask          # + downsample, relu,
                                                            # re-zero pad columns

    # keep the activation resident in VMEM for the next block (lane-0 aligned,
    # unmasked store; mask row at cmax stays untouched)
    @pl.when(blk + 1 < nblk)
    def _():
        act_ref[0:nout, :] = out

    if cmax > nout:   # python-static: channel-pad rows exist only if Nin > Nout
        # stale input channels are inert (later blocks have zero weight columns
        # there) — zero them once after block 0 for hygiene, not every step.
        @pl.when((blk == 0) & (blk + 1 < nblk))
        def _():
            act_ref[nout:cmax, :] = jnp.zeros((cmax - nout, ntot), jnp.float32)

    # only the last block's result goes back to HBM
    @pl.when(blk == nblk - 1)
    def _():
        out_ref[...] = out


# ---------------------------------------------------------------------------
# One-time parameter packing (kernel-native layout, stacked over blocks)
# ---------------------------------------------------------------------------
def pack_resid_part_params(params_list, Nin):
    Nout = params_list[0]["wd"].shape[0]
    NCh = params_list[0]["w1"].shape[0]
    # the module applies the shared bn1(Nout) to the conv1 (NCh-channel) output
    assert NCh == Nout, "shared bn1(Nout) on conv1(NCh) output requires NCh == Nout"
    Cmax = max(Nin, Nout)
    Cc = NCh + Nout
    Wv = ((NCh + 3 + 127) // 128) * 128     # [w2 | gamma | beta | b2], lane-padded

    wtaps, wvecs = [], []
    for p in params_list:
        cin = p["w1"].shape[1]
        # (Co, Cin, 3) -> channel-pad to Cmax, stack main over downsample rows,
        # reorder tap-major: (3, Cc, Cmax)
        w1 = jnp.pad(p["w1"], ((0, 0), (0, Cmax - cin), (0, 0)))
        wd = jnp.pad(p["wd"], ((0, 0), (0, Cmax - cin), (0, 0)))
        wtaps.append(jnp.transpose(jnp.concatenate([w1, wd], axis=0), (2, 0, 1)))

        # NOTE: conv biases b1/bd are omitted on purpose — they cancel exactly
        # under training-mode BatchNorm.
        vec = jnp.zeros((Cc, Wv), jnp.float32)
        vec = vec.at[0:Nout, 0:NCh].set(p["w2"][:, :, 0])
        vec = vec.at[:, NCh].set(jnp.concatenate([p["gamma"], p["gamma"]]))
        vec = vec.at[:, NCh + 1].set(jnp.concatenate([p["beta"], p["beta"]]))
        vec = vec.at[0:Nout, NCh + 2].set(p["b2"])
        wvecs.append(vec)

    wtap = jnp.stack(wtaps).astype(jnp.float32)   # (Nblk, 3, Cc, Cmax)
    wvec = jnp.stack(wvecs).astype(jnp.float32)   # (Nblk, Cc, Wv)
    return wtap, wvec


# ---------------------------------------------------------------------------
# Forward wrapper: one pallas_call for the whole ResidPart
# ---------------------------------------------------------------------------
def resid_part_forward(x_ncl, packed, *, roll_is_np=True):
    wtap, wvec = packed
    B, Cin, L = x_ncl.shape
    Nblk, _, Cc, Cmax = wtap.shape
    Wv = wvec.shape[2]
    Nout = Cc // 2

    # lane-dense residency layout: per-batch segment of Lseg columns, cols
    # [0, L) valid and [L, Lseg) zero; B*Lseg is a multiple of 128 so every
    # kernel store is unmasked, and the trailing zero columns double as the
    # conv's zero padding under the circular roll.
    q = 128 // math.gcd(B, 128)
    Lseg = ((L + 1 + q - 1) // q) * q
    Ntot = B * Lseg

    # NCL -> (Cmax+1, Ntot) slab once at the boundary: channel-pad, segment-pad,
    # append the valid-column mask as the last row.
    x = jnp.transpose(x_ncl, (1, 0, 2)).astype(jnp.float32)        # (Cin, B, L)
    x = jnp.pad(x, ((0, Cmax - Cin), (0, 0), (0, Lseg - L)))       # (Cmax, B, Lseg)
    mask = jnp.pad(jnp.ones((1, B, L), jnp.float32),
                   ((0, 0), (0, 0), (0, Lseg - L)))                # (1, B, Lseg)
    xm = jnp.concatenate([x, mask], axis=0).reshape(Cmax + 1, Ntot)

    kernel = functools.partial(_resid_part_kernel,
                               nvalid=B * L, roll_is_np=roll_is_np)

    # explicit scoped-VMEM budget (v5e default is only 16 MiB)
    est = 4 * ((Cmax + 1) * Ntot                 # resident activation + mask row
               + Nout * Ntot                     # output window
               + 2 * (3 * Cc * Cmax + Cc * Wv)   # double-buffered weight blocks
               + 3 * Cmax * Ntot                 # rolled-tap temporaries
               + 8 * Cc * Ntot)                  # z/zn/intermediate headroom
    vmem_limit = int(min(max(2 * est, 16 * 1024 * 1024), 48 * 1024 * 1024))
    # TODO(synk): configs whose working set exceeds ~48 MiB need a spatially
    #             tiled (accumulated-stat) BN to fit v7x's 64 MiB VMEM.

    out_flat = pl.pallas_call(
        kernel,
        out_shape=jax.ShapeDtypeStruct((Nout, Ntot), jnp.float32),
        grid_spec=pltpu.PrefetchScalarGridSpec(
            num_scalar_prefetch=0,
            grid=(Nblk,),
            in_specs=[
                pl.BlockSpec(memory_space=pl.ANY),                       # input+mask (HBM)
                pl.BlockSpec((1, 3, Cc, Cmax), lambda b: (b, 0, 0, 0)),  # conv taps
                pl.BlockSpec((1, Cc, Wv), lambda b: (b, 0, 0)),          # w2|gamma|beta|b2
            ],
            out_specs=pl.BlockSpec((Nout, Ntot), lambda b: (0, 0)),
            scratch_shapes=[
                pltpu.VMEM((Cmax + 1, Ntot), jnp.float32),
                pltpu.SemaphoreType.DMA,
            ],
        ),
        compiler_params=pltpu.CompilerParams(
            dimension_semantics=("arbitrary",),
            vmem_limit_bytes=vmem_limit,
        ),
    )(xm, wtap, wvec)

    # (Nout, Ntot) lane-dense slab -> (B, Nout, L)
    out = out_flat.reshape(Nout, B, Lseg)[:, :, :L]
    return jnp.transpose(out, (1, 0, 2))


# ---------------------------------------------------------------------------
# Deterministic synthetic parameters (shapes per the module's __init__)
# ---------------------------------------------------------------------------
def init_block_params(key, Nin, Nout, NCh):
    assert NCh == Nout, "shared bn1(Nout) on conv1(NCh) output requires NCh == Nout"
    ks = jax.random.split(key, 8)
    g = lambda k, shape, s=0.2: s * jax.random.normal(k, shape, jnp.float32)
    return dict(
        w1=g(ks[0], (NCh, Nin, 3)), b1=g(ks[1], (NCh,)),
        w2=g(ks[2], (Nout, NCh, 1)), b2=g(ks[3], (Nout,)),
        gamma=1.0 + 0.1 * jax.random.normal(ks[4], (Nout,), jnp.float32),
        beta=0.1 * jax.random.normal(ks[5], (Nout,), jnp.float32),
        wd=g(ks[6], (Nout, Nin, 3)), bd=g(ks[7], (Nout,)),
    )


def init_resid_part(key, Nblk, Nin, Nout, NCh):
    keys = jax.random.split(key, Nblk)
    params = []
    for i in range(Nblk):
        cin = Nin if i == 0 else Nout
        params.append(init_block_params(keys[i], cin, Nout, NCh))
    return params


# ---------------------------------------------------------------------------
# Pure-JAX reference (independent check of the kernel math, biases included)
# ---------------------------------------------------------------------------
def _ref_block(x, p):
    def conv(xx, w, b, pad):
        y = lax.conv_general_dilated(
            xx, w, window_strides=(1,), padding=[(pad, pad)],
            dimension_numbers=("NCH", "OIH", "NCH"),
            precision=lax.Precision.HIGHEST)
        return y + b[None, :, None]

    def bn(y):
        mean = y.mean(axis=(0, 2), keepdims=True)
        var = ((y - mean) ** 2).mean(axis=(0, 2), keepdims=True)
        return (y - mean) / jnp.sqrt(var + 1e-5) * p["gamma"][None, :, None] \
            + p["beta"][None, :, None]

    y = conv(x, p["w1"], p["b1"], 1)
    y = jax.nn.relu(bn(y))
    y = conv(y, p["w2"], p["b2"], 0)
    d = bn(conv(x, p["wd"], p["bd"], 1))
    return jax.nn.relu(d + y)


def _ref_part(x, params_list):
    for p in params_list:
        x = _ref_block(x, p)
    return x


# ---------------------------------------------------------------------------
if __name__ == "__main__":
    key = jax.random.PRNGKey(0)
    Nblk, Nin, Nout, NCresidBlk = 2, 4, 8, 8      # NCresidBlk == Nout (shared bn1)
    B, L = 2, 16

    kx, kp = jax.random.split(key)
    x = jax.random.normal(kx, (B, Nin, L), jnp.float32)   # NCL, like PyTorch Conv1d
    params = init_resid_part(kp, Nblk, Nin, Nout, NCresidBlk)

    packed = pack_resid_part_params(params, Nin)          # pre-pack once, outside forward
    roll_is_np = _roll_matches_numpy()                    # one-time probe, outside jit
    fwd = jax.jit(functools.partial(resid_part_forward, roll_is_np=roll_is_np))
    out = jax.block_until_ready(fwd(x, packed))

    ref = _ref_part(x, params)
    assert out.shape == (B, Nout, L), out.shape
    max_err = float(jnp.max(jnp.abs(out - ref)))
    assert max_err < 1e-4, f"kernel vs reference mismatch: max abs err = {max_err}"

    print("KERNEL_OK")
</pallas_src>

<mosaic_0001>
module attributes {stable_mosaic.version = 11 : i64} {
  func.func @probe(%arg0: memref<8x128xf32, #tpu.memory_space<vmem>>, %arg1: memref<8x128xf32, #tpu.memory_space<vmem>>) attributes {dimension_semantics = [], scalar_prefetch = 0 : i64, scratch_operands = 0 : i64, tpu.core_type = #tpu.core_type<tc>} {
    %c0 = arith.constant 0 : index
    %c0_0 = arith.constant 0 : index
    %0 = vector.load %arg0[%c0, %c0_0] : memref<8x128xf32, #tpu.memory_space<vmem>>, vector<8x128xf32>
    %c1_i32 = arith.constant 1 : i32
    %1 = tpu.dynamic_rotate %0 by %c1_i32 dim 1 : vector<8x128xf32>, i32 -> vector<8x128xf32>
    %c0_1 = arith.constant 0 : index
    %c0_2 = arith.constant 0 : index
    %2 = vector.load %arg1[%c0_1, %c0_2] : memref<8x128xf32, #tpu.memory_space<vmem>>, vector<8x128xf32>
    tpu.vector_store %arg1[%c0_1, %c0_2], %1 {strides = array<i32>} : memref<8x128xf32, #tpu.memory_space<vmem>>, vector<8x128xf32>,
    return
  }
}

</mosaic_0001>

<llo_original>
// kernel: tpu_custom_call.1
$region0: #{tpu_custom_call.1}
  #allocation0 [shape = 'u32[]', space=smem, size = 0x4, offset = 0x4, fixed_abs, tag = 'smem constant byte address 0x4 - core index']
  #allocation1 [shape = 'u32[144,128]{1,0:T(1,128)}', space=vmem, size = 0x12000, scoped, tag = 'internal scratch']
  %s0 = inlined_call_operand.hbm [shape: f32[8,128], index: 0, kind: input, shape index: {}]
  %s1 = inlined_call_operand.hbm [shape: f32[8,128], index: 1, kind: output, shape index: {}]
  %s2 = sld [smem:[#allocation0]]
  $region18: #{tpu_custom_call.1} parent=0
    _
  %s4 = ssub.s32 1, %s2
  %s5 = scalar_select 0, %s4, %s2
  $region1: #{tpu_custom_call.1} parent=0
    #allocation2 [shape = 'u8[4096]{0}', space=vmem, size = 0x1000, scoped, tag = 'input window, operand 0, single buffered']
    #allocation3 [shape = 's32[1]{0}', space=sflag, size = 0x4, scoped, tag = 'scoped memory for tpu_custom_call.1']
    #allocation4 [shape = 's32[1]{0}', space=sflag, size = 0x4, scoped, tag = 'scoped memory for tpu_custom_call.1']
    #allocation5 [shape = 'u8[4096]{0}', space=vmem, size = 0x1000, scoped, tag = 'output window, operand 0, single buffered']
    %6 = vsyncpa [#allocation3], 0
    %7 = vsyncpa [#allocation4], 0
    // Predicated region
    $region2: #{tpu_custom_call.1} parent=1 // pred_check
      _
    $region3: #{tpu_custom_call.1} parent=1 // pred_check_branch
      %9 = sbr.rel (0) target = $region5
    $region4: #{tpu_custom_call.1} parent=1 // pred_region
      %s11 = ssub.s32 128, 128
      %12 = vsyncadd [#allocation3], %s11
      %s14 = sshll.u32 [#allocation2], 4
      %s15 = int_to_ptr.vmem [resolvable:$true] %s14
      %17 = dma.hbm_to_vmem [thread:$0]  %s0, 128, %s15, [#allocation3]
    $region5: #{tpu_custom_call.1} parent=1 // pred_fallthru
      _
    // Predicated region
    $region6: #{tpu_custom_call.1} parent=1 // pred_check
      _
    $region7: #{tpu_custom_call.1} parent=1 // pred_check_branch
      %19 = sbr.rel (0) target = $region9
    $region8: #{tpu_custom_call.1} parent=1 // pred_region
      %20 = dma.done [#allocation3], 128
    $region9: #{tpu_custom_call.1} parent=1 // pred_fallthru
      _
    %v21 = vld [vmem:[#allocation2] sm:$0xff]
    %22 = vrot.lane.b32.xlu0 %v21, 1
    %v23 = vpop.permute.xlu0 %22
    %24 = vst [vmem:[#allocation5] sm:$0xff] %v23
    // Predicated region
    $region10: #{tpu_custom_call.1} parent=1 // pred_check
      _
    $region11: #{tpu_custom_call.1} parent=1 // pred_check_branch
      %26 = sbr.rel (0) target = $region13
    $region12: #{tpu_custom_call.1} parent=1 // pred_region
      %s28 = ssub.s32 128, 128
      %29 = vsyncadd [#allocation4], %s28
      %s31 = sshll.u32 [#allocation5], 4
      %s32 = int_to_ptr.vmem [resolvable:$true] %s31
      %34 = dma.vmem_to_hbm [thread:$0]  %s32, 128, %s1, [#allocation4]
    $region13: #{tpu_custom_call.1} parent=1 // pred_fallthru
      _
    // Predicated region
    $region14: #{tpu_custom_call.1} parent=1 // pred_check
      _
    $region15: #{tpu_custom_call.1} parent=1 // pred_check_branch
      %36 = sbr.rel (0) target = $region17
    $region16: #{tpu_custom_call.1} parent=1 // pred_region
      %37 = dma.done [#allocation4], 128
    $region17: #{tpu_custom_call.1} parent=1 // pred_fallthru
      _
    %38 = vsyncpa [#allocation3], 1
    %39 = vsyncpa [#allocation4], 1

</llo_original>
